<compile_context>
chip_gen: v7x
topology: tpu7x:2x2x1
jax: 0.10.0
libtpu: 0.0.40
codegen_flags: <defaults>
</compile_context>

<pallas_src>
import functools

import jax
import jax.numpy as jnp
from jax.experimental import pallas as pl
from jax.experimental.pallas import tpu as pltpu


# ----------------------------------------------------------------------------
# Fused MLP kernel: out = (relu(relu(x@W1+b1)@W2+b2))@W3 + b3
# ----------------------------------------------------------------------------
def linear_encoder_kernel(x_ref, w1_ref, b1_ref, w2_ref, b2_ref,
                          w3_ref, b3_ref, o_ref):
    h = jnp.dot(x_ref[...], w1_ref[...],
                preferred_element_type=jnp.float32) + b1_ref[...]
    h = jnp.maximum(h, 0.0)
    h = jnp.dot(h, w2_ref[...],
                preferred_element_type=jnp.float32) + b2_ref[...]
    h = jnp.maximum(h, 0.0)
    o = jnp.dot(h, w3_ref[...],
                preferred_element_type=jnp.float32) + b3_ref[...]
    o_ref[...] = o.astype(o_ref.dtype)


def _round_up(x, m):
    return ((x + m - 1) // m) * m


def linear_encoder(x, params, *, block_rows=None):
    """x: (..., input_dim). Weights stored transposed: w* is (in, out), b* is (1, out)."""
    w1, b1 = params["w1"], params["b1"]
    w2, b2 = params["w2"], params["b2"]
    w3, b3 = params["w3"], params["b3"]

    I = w1.shape[0]
    H = w1.shape[1]
    O = w3.shape[1]

    lead_shape = x.shape[:-1]
    x2 = x.reshape(-1, I)
    B = x2.shape[0]

    # Pick a sublane-friendly row tile; pad rows so every block is full.
    if block_rows is None:
        block_rows = min(512, _round_up(max(B, 1), 8))
    Bp = _round_up(B, block_rows)
    if Bp != B:
        x2 = jnp.pad(x2, ((0, Bp - B), (0, 0)))

    grid = (Bp // block_rows,)

    out = pl.pallas_call(
        linear_encoder_kernel,
        out_shape=jax.ShapeDtypeStruct((Bp, O), x.dtype),
        grid_spec=pltpu.PrefetchScalarGridSpec(
            num_scalar_prefetch=0,
            grid=grid,
            in_specs=[
                pl.BlockSpec((block_rows, I), lambda i: (i, 0)),  # x row tile
                pl.BlockSpec((I, H), lambda i: (0, 0)),           # w1
                pl.BlockSpec((1, H), lambda i: (0, 0)),           # b1
                pl.BlockSpec((H, H), lambda i: (0, 0)),           # w2
                pl.BlockSpec((1, H), lambda i: (0, 0)),           # b2
                pl.BlockSpec((H, O), lambda i: (0, 0)),           # w3
                pl.BlockSpec((1, O), lambda i: (0, 0)),           # b3
            ],
            out_specs=pl.BlockSpec((block_rows, O), lambda i: (i, 0)),
        ),
        compiler_params=pltpu.CompilerParams(
            dimension_semantics=("parallel",)),
    )(x2, w1, b1, w2, b2, w3, b3)

    out = out[:B]
    return out.reshape(*lead_shape, O)


# ----------------------------------------------------------------------------
# Pure-JAX reference (for correctness checking)
# ----------------------------------------------------------------------------
def linear_encoder_ref(x, params):
    h = jnp.maximum(x @ params["w1"] + params["b1"][0], 0.0)
    h = jnp.maximum(h @ params["w2"] + params["b2"][0], 0.0)
    return h @ params["w3"] + params["b3"][0]


if __name__ == "__main__":
    # Small shapes consistent with the module's forward().
    BATCH, INPUT_DIM, HIDDEN_DIM, OUTPUT_DIM = 2, 64, 32, 16

    key = jax.random.PRNGKey(0)
    ks = jax.random.split(key, 7)
    scale = 0.1
    params = {
        # stored pre-transposed: (in, out); biases as (1, out)
        "w1": scale * jax.random.normal(ks[0], (INPUT_DIM, HIDDEN_DIM), jnp.float32),
        "b1": scale * jax.random.normal(ks[1], (1, HIDDEN_DIM), jnp.float32),
        "w2": scale * jax.random.normal(ks[2], (HIDDEN_DIM, HIDDEN_DIM), jnp.float32),
        "b2": scale * jax.random.normal(ks[3], (1, HIDDEN_DIM), jnp.float32),
        "w3": scale * jax.random.normal(ks[4], (HIDDEN_DIM, OUTPUT_DIM), jnp.float32),
        "b3": scale * jax.random.normal(ks[5], (1, OUTPUT_DIM), jnp.float32),
    }
    x = jax.random.normal(ks[6], (BATCH, INPUT_DIM), jnp.float32)

    out = linear_encoder(x, params)
    out = jax.block_until_ready(out)

    out_ref = linear_encoder_ref(x, params)

    assert out.shape == (BATCH, OUTPUT_DIM)
    assert jnp.allclose(out, out_ref, rtol=2e-3, atol=2e-3)

    print("KERNEL_OK")
</pallas_src>

<mosaic_0001>
module attributes {stable_mosaic.version = 11 : i64} {
  func.func @linear_encoder_kernel(%arg0: i32, %arg1: memref<8x64xf32, #tpu.memory_space<vmem>>, %arg2: memref<64x32xf32, #tpu.memory_space<vmem>>, %arg3: memref<1x32xf32, #tpu.memory_space<vmem>>, %arg4: memref<32x32xf32, #tpu.memory_space<vmem>>, %arg5: memref<1x32xf32, #tpu.memory_space<vmem>>, %arg6: memref<32x16xf32, #tpu.memory_space<vmem>>, %arg7: memref<1x16xf32, #tpu.memory_space<vmem>>, %arg8: memref<8x16xf32, #tpu.memory_space<vmem>>) attributes {dimension_semantics = [#tpu.dimension_semantics<parallel>], iteration_bounds = array<i64: 1>, scalar_prefetch = 0 : i64, scratch_operands = 0 : i64, tpu.core_type = #tpu.core_type<tc>, window_params = [{transform_indices = @transform_0, window_bounds = array<i64: 8, 64>}, {pipeline_mode = #tpu.pipeline_mode<synchronous>, transform_indices = @transform_1, window_bounds = array<i64: 64, 32>}, {pipeline_mode = #tpu.pipeline_mode<synchronous>, transform_indices = @transform_2, window_bounds = array<i64: 1, 32>}, {pipeline_mode = #tpu.pipeline_mode<synchronous>, transform_indices = @transform_3, window_bounds = array<i64: 32, 32>}, {pipeline_mode = #tpu.pipeline_mode<synchronous>, transform_indices = @transform_4, window_bounds = array<i64: 1, 32>}, {pipeline_mode = #tpu.pipeline_mode<synchronous>, transform_indices = @transform_5, window_bounds = array<i64: 32, 16>}, {pipeline_mode = #tpu.pipeline_mode<synchronous>, transform_indices = @transform_6, window_bounds = array<i64: 1, 16>}, {transform_indices = @transform_7, window_bounds = array<i64: 8, 16>}]} {
    %c0 = arith.constant 0 : index
    %c0_0 = arith.constant 0 : index
    %0 = vector.load %arg1[%c0, %c0_0] : memref<8x64xf32, #tpu.memory_space<vmem>>, vector<8x64xf32>
    %c0_1 = arith.constant 0 : index
    %c0_2 = arith.constant 0 : index
    %1 = vector.load %arg2[%c0_1, %c0_2] : memref<64x32xf32, #tpu.memory_space<vmem>>, vector<64x32xf32>
    %cst = arith.constant dense<0.000000e+00> : vector<8x32xf32>
    %2 = tpu.matmul %0, %1, %cst {dimension_numbers = #tpu.dot_dimension_numbers<[1], [0], [0], [1], [0, 0, 1, 1], [], []>} : vector<8x64xf32>, vector<64x32xf32>, vector<8x32xf32> -> vector<8x32xf32>
    %c0_3 = arith.constant 0 : index
    %c0_4 = arith.constant 0 : index
    %3 = vector.load %arg3[%c0_3, %c0_4] : memref<1x32xf32, #tpu.memory_space<vmem>>, vector<1x32xf32>
    %4 = vector.broadcast %3 : vector<1x32xf32> to vector<8x32xf32>
    %5 = arith.addf %2, %4 : vector<8x32xf32>
    %cst_5 = arith.constant 0.000000e+00 : f32
    %6 = vector.broadcast %cst_5 : f32 to vector<8x32xf32>
    %7 = arith.maximumf %5, %6 : vector<8x32xf32>
    %c0_6 = arith.constant 0 : index
    %c0_7 = arith.constant 0 : index
    %8 = vector.load %arg4[%c0_6, %c0_7] : memref<32x32xf32, #tpu.memory_space<vmem>>, vector<32x32xf32>
    %cst_8 = arith.constant dense<0.000000e+00> : vector<8x32xf32>
    %9 = tpu.matmul %7, %8, %cst_8 {dimension_numbers = #tpu.dot_dimension_numbers<[1], [0], [0], [1], [0, 0, 1, 1], [], []>} : vector<8x32xf32>, vector<32x32xf32>, vector<8x32xf32> -> vector<8x32xf32>
    %c0_9 = arith.constant 0 : index
    %c0_10 = arith.constant 0 : index
    %10 = vector.load %arg5[%c0_9, %c0_10] : memref<1x32xf32, #tpu.memory_space<vmem>>, vector<1x32xf32>
    %11 = vector.broadcast %10 : vector<1x32xf32> to vector<8x32xf32>
    %12 = arith.addf %9, %11 : vector<8x32xf32>
    %cst_11 = arith.constant 0.000000e+00 : f32
    %13 = vector.broadcast %cst_11 : f32 to vector<8x32xf32>
    %14 = arith.maximumf %12, %13 : vector<8x32xf32>
    %c0_12 = arith.constant 0 : index
    %c0_13 = arith.constant 0 : index
    %15 = vector.load %arg6[%c0_12, %c0_13] : memref<32x16xf32, #tpu.memory_space<vmem>>, vector<32x16xf32>
    %cst_14 = arith.constant dense<0.000000e+00> : vector<8x16xf32>
    %16 = tpu.matmul %14, %15, %cst_14 {dimension_numbers = #tpu.dot_dimension_numbers<[1], [0], [0], [1], [0, 0, 1, 1], [], []>} : vector<8x32xf32>, vector<32x16xf32>, vector<8x16xf32> -> vector<8x16xf32>
    %c0_15 = arith.constant 0 : index
    %c0_16 = arith.constant 0 : index
    %17 = vector.load %arg7[%c0_15, %c0_16] : memref<1x16xf32, #tpu.memory_space<vmem>>, vector<1x16xf32>
    %18 = vector.broadcast %17 : vector<1x16xf32> to vector<8x16xf32>
    %19 = arith.addf %16, %18 : vector<8x16xf32>
    %c0_17 = arith.constant 0 : index
    %c0_18 = arith.constant 0 : index
    %20 = vector.load %arg8[%c0_17, %c0_18] : memref<8x16xf32, #tpu.memory_space<vmem>>, vector<8x16xf32>
    tpu.vector_store %arg8[%c0_17, %c0_18], %19 {strides = array<i32>} : memref<8x16xf32, #tpu.memory_space<vmem>>, vector<8x16xf32>,
    return
  }
  func.func @transform_0(%arg0: i32) -> (i32, i32) {
    %c0_i32 = arith.constant 0 : i32
    %c0_i32_0 = arith.constant 0 : i32
    return %arg0, %c0_i32 : i32, i32
  }
  func.func @transform_1(%arg0: i32) -> (i32, i32) {
    %c0_i32 = arith.constant 0 : i32
    %c0_i32_0 = arith.constant 0 : i32
    %c0_i32_1 = arith.constant 0 : i32
    return %c0_i32, %c0_i32_0 : i32, i32
  }
  func.func @transform_2(%arg0: i32) -> (i32, i32) {
    %c0_i32 = arith.constant 0 : i32
    %c0_i32_0 = arith.constant 0 : i32
    %c0_i32_1 = arith.constant 0 : i32
    return %c0_i32, %c0_i32_0 : i32, i32
  }
  func.func @transform_3(%arg0: i32) -> (i32, i32) {
    %c0_i32 = arith.constant 0 : i32
    %c0_i32_0 = arith.constant 0 : i32
    %c0_i32_1 = arith.constant 0 : i32
    return %c0_i32, %c0_i32_0 : i32, i32
  }
  func.func @transform_4(%arg0: i32) -> (i32, i32) {
    %c0_i32 = arith.constant 0 : i32
    %c0_i32_0 = arith.constant 0 : i32
    %c0_i32_1 = arith.constant 0 : i32
    return %c0_i32, %c0_i32_0 : i32, i32
  }
  func.func @transform_5(%arg0: i32) -> (i32, i32) {
    %c0_i32 = arith.constant 0 : i32
    %c0_i32_0 = arith.constant 0 : i32
    %c0_i32_1 = arith.constant 0 : i32
    return %c0_i32, %c0_i32_0 : i32, i32
  }
  func.func @transform_6(%arg0: i32) -> (i32, i32) {
    %c0_i32 = arith.constant 0 : i32
    %c0_i32_0 = arith.constant 0 : i32
    %c0_i32_1 = arith.constant 0 : i32
    return %c0_i32, %c0_i32_0 : i32, i32
  }
  func.func @transform_7(%arg0: i32) -> (i32, i32) {
    %c0_i32 = arith.constant 0 : i32
    %c0_i32_0 = arith.constant 0 : i32
    return %arg0, %c0_i32 : i32, i32
  }
}

</mosaic_0001>

<llo_original>
// kernel: tpu_custom_call.1
$region0: #{tpu_custom_call.1}
  #allocation0 [shape = 'u32[]', space=smem, size = 0x4, offset = 0x4, fixed_abs, tag = 'smem constant byte address 0x4 - core index']
  #allocation1 [shape = 'u32[144,128]{1,0:T(1,128)}', space=vmem, size = 0x12000, scoped, tag = 'internal scratch']
  %s0 = inlined_call_operand.vmem [shape: f32[8,64], index: 0, kind: input, shape index: {}]
  %s1 = inlined_call_operand.vmem [shape: f32[64,32], index: 1, kind: input, shape index: {}]
  %s2 = inlined_call_operand.vmem [shape: f32[1,32], index: 2, kind: input, shape index: {}]
  %s3 = inlined_call_operand.vmem [shape: f32[32,32], index: 3, kind: input, shape index: {}]
  %s4 = inlined_call_operand.vmem [shape: f32[1,32], index: 4, kind: input, shape index: {}]
  %s5 = inlined_call_operand.vmem [shape: f32[32,16], index: 5, kind: input, shape index: {}]
  %s6 = inlined_call_operand.vmem [shape: f32[1,16], index: 6, kind: input, shape index: {}]
  %s7 = inlined_call_operand.hbm [shape: f32[8,16], index: 7, kind: output, shape index: {}]
  %s8 = sld [smem:[#allocation0]]
  $region38: #{tpu_custom_call.1} parent=0
    _
  %s10 = ssub.s32 1, %s8
  %s11 = scalar_select 0, %s10, %s8
  $region1: #{tpu_custom_call.1} parent=0
    #allocation2 [shape = 'u8[4096]{0}', space=vmem, size = 0x1000, scoped, tag = 'output window, operand 0, single buffered']
    #allocation3 [shape = 's32[1]{0}', space=sflag, size = 0x4, scoped, tag = 'scoped memory for tpu_custom_call.1']
    %12 = vsyncpa [#allocation3], 0
    // Predicated region
    $region2: #{tpu_custom_call.1} parent=1 // pred_check
      _
    $region3: #{tpu_custom_call.1} parent=1 // pred_check_branch
      %14 = sbr.rel (0) target = $region5
    $region4: #{tpu_custom_call.1} parent=1 // pred_region
      _
    $region5: #{tpu_custom_call.1} parent=1 // pred_fallthru
      _
    // Predicated region
    $region6: #{tpu_custom_call.1} parent=1 // pred_check
      _
    $region7: #{tpu_custom_call.1} parent=1 // pred_check_branch
      %16 = sbr.rel (0) target = $region9
    $region8: #{tpu_custom_call.1} parent=1 // pred_region
      _
    $region9: #{tpu_custom_call.1} parent=1 // pred_fallthru
      _
    // Predicated region
    $region10: #{tpu_custom_call.1} parent=1 // pred_check
      _
    $region11: #{tpu_custom_call.1} parent=1 // pred_check_branch
      %18 = sbr.rel (0) target = $region13
    $region12: #{tpu_custom_call.1} parent=1 // pred_region
      _
    $region13: #{tpu_custom_call.1} parent=1 // pred_fallthru
      _
    // Predicated region
    $region14: #{tpu_custom_call.1} parent=1 // pred_check
      _
    $region15: #{tpu_custom_call.1} parent=1 // pred_check_branch
      %20 = sbr.rel (0) target = $region17
    $region16: #{tpu_custom_call.1} parent=1 // pred_region
      _
    $region17: #{tpu_custom_call.1} parent=1 // pred_fallthru
      _
    // Predicated region
    $region18: #{tpu_custom_call.1} parent=1 // pred_check
      _
    $region19: #{tpu_custom_call.1} parent=1 // pred_check_branch
      %22 = sbr.rel (0) target = $region21
    $region20: #{tpu_custom_call.1} parent=1 // pred_region
      _
    $region21: #{tpu_custom_call.1} parent=1 // pred_fallthru
      _
    // Predicated region
    $region22: #{tpu_custom_call.1} parent=1 // pred_check
      _
    $region23: #{tpu_custom_call.1} parent=1 // pred_check_branch
      %24 = sbr.rel (0) target = $region25
    $region24: #{tpu_custom_call.1} parent=1 // pred_region
      _
    $region25: #{tpu_custom_call.1} parent=1 // pred_fallthru
      _
    // Predicated region
    $region26: #{tpu_custom_call.1} parent=1 // pred_check
      _
    $region27: #{tpu_custom_call.1} parent=1 // pred_check_branch
      %26 = sbr.rel (0) target = $region29
    $region28: #{tpu_custom_call.1} parent=1 // pred_region
      _
    $region29: #{tpu_custom_call.1} parent=1 // pred_fallthru
      _
    %v27 = vld [vmem:[%s0] sm:$0xff]
    %v28 = vld [vmem:[%s1] sm:$0xff]
    %v29 = vld [vmem:[%s1 + $0x8] sm:$0xff]
    %v30 = vld [vmem:[%s1 + $0x10] sm:$0xff]
    %v31 = vld [vmem:[%s1 + $0x18] sm:$0xff]
    %v32 = vld [vmem:[%s1 + $0x20] sm:$0xff]
    %v33 = vld [vmem:[%s1 + $0x28] sm:$0xff]
    %v34 = vld [vmem:[%s1 + $0x30] sm:$0xff]
    %v35 = vld [vmem:[%s1 + $0x38] sm:$0xff]
    %v36 = vld [vmem:[%s2] sm:$0x1]
    %v38 = vlaneseq
    %v39 = vshrl.u32 %v38, 7
    %v40 = vsub.s32 0, %v39
    %v41 = vrot.slane %v36, %v40
    %vm43 = vcmask 523264
    %v45 = vsel %vm43, %v27, 0
    %47 = vmatprep.subr.mxu0 0.0
    %48 = vmatpush1.msra.mxu0 %v28
    %49 = vmatprep.subr.mxu0 0.0
    %50 = vmatpush1.msra.mxu0 %v29
    %51 = vmatprep.subr.mxu0 0.0
    %52 = vmatpush1.msra.mxu0 %v30
    %53 = vmatprep.subr.mxu0 0.0
    %54 = vmatpush1.msra.mxu0 %v31
    %55 = vmatprep.subr.mxu0 0.0
    %56 = vmatpush1.msra.mxu0 %v32
    %57 = vmatprep.subr.mxu0 0.0
    %58 = vmatpush1.msra.mxu0 %v33
    %59 = vmatprep.subr.mxu0 0.0
    %60 = vmatpush1.msra.mxu0 %v34
    %61 = vmatprep.subr.mxu0 0.0
    %62 = vmatpush1.msra.mxu0 %v35
    %63 = vmatprep.subr.mxu0 0.0
    %64 = vmatpush1.msra.mxu0 0.0
    %65 = vmatprep.subr.mxu0 0.0
    %66 = vmatpush1.msra.mxu0 0.0
    %67 = vmatprep.subr.mxu0 0.0
    %68 = vmatpush1.msra.mxu0 0.0
    %69 = vmatprep.subr.mxu0 0.0
    %70 = vmatpush1.msra.mxu0 0.0
    %71 = vmatprep.subr.mxu0 0.0
    %72 = vmatpush1.msra.mxu0 0.0
    %73 = vmatprep.subr.mxu0 0.0
    %74 = vmatpush1.msra.mxu0 0.0
    %75 = vmatprep.subr.mxu0 0.0
    %76 = vmatpush1.msra.mxu0 0.0
    %77 = vmatprep.subr.mxu0 0.0
    %78 = vmatpush1.msra.mxu0 0.0
    %79 = vmatprep.subr.mxu0 0.0
    %80 = vmatpush1.msra.mxu0 0.0
    %81 = vmatprep.subr.mxu0 0.0
    %82 = vmatpush1.msra.mxu0 0.0
    %83 = vmatprep.subr.mxu0 0.0
    %84 = vmatpush1.msra.mxu0 0.0
    %85 = vmatprep.subr.mxu0 0.0
    %86 = vmatpush1.msra.mxu0 0.0
    %87 = vmatprep.subr.mxu0 0.0
    %88 = vmatpush1.msra.mxu0 0.0
    %89 = vmatprep.subr.mxu0 0.0
    %90 = vmatpush1.msra.mxu0 0.0
    %91 = vmatprep.subr.mxu0 0.0
    %92 = vmatpush1.msra.mxu0 0.0
    %93 = vmatprep.subr.mxu0 0.0
    %94 = vmatpush1.msra.mxu0 0.0
    %95 = vmatprep.subr.mxu0 0.0
    %96 = vmatpush1.msra.mxu0 0.0
    %97 = vmatprep.subr.mxu0 0.0
    %98 = vmatpush1.msra.mxu0 0.0
    %99 = vmatprep.subr.mxu0 0.0
    %100 = vmatpush1.msra.mxu0 0.0
    %101 = vmatprep.subr.mxu0 0.0
    %102 = vmatpush1.msra.mxu0 0.0
    %103 = vmatprep.subr.mxu0 0.0
    %104 = vmatpush1.msra.mxu0 0.0
    %105 = vmatprep.subr.mxu0 0.0
    %106 = vmatpush1.msra.mxu0 0.0
    %107 = vmatprep.subr.mxu0 0.0
    %108 = vmatpush1.msra.mxu0 0.0
    %109 = vmatprep.subr.mxu0 0.0
    %110 = vmatpush1.msra.mxu0 0.0
    %111 = vmatprep.mubr.f32.mxu0 0.0
    %112 = vmatmul.mubr.f32.gmra.mrb[0].mxu0 %v45
    %v113 = vpop.f32.mrb[0].mxu0
    %v114 = vadd.f32 %v41, %v113
    %v115 = vpop.f32.mrb[0].mxu0
    %116 = vdwg.mxu0
    %v117 = vmax.f32 %v114, 0.0
    %v118 = vld [vmem:[%s3] sm:$0xff]
    %v119 = vld [vmem:[%s3 + $0x8] sm:$0xff]
    %v120 = vld [vmem:[%s3 + $0x10] sm:$0xff]
    %v121 = vld [vmem:[%s3 + $0x18] sm:$0xff]
    %v122 = vld [vmem:[%s4] sm:$0x1]
    %v124 = vlaneseq
    %v125 = vshrl.u32 %v124, 7
    %v126 = vsub.s32 0, %v125
    %v127 = vrot.slane %v122, %v126
    %vm129 = vcmask 261120
    %v131 = vsel %vm129, %v117, 0
    %133 = vmatprep.subr.mxu0 0.0
    %134 = vmatpush1.msra.mxu0 %v118
    %135 = vmatprep.subr.mxu0 0.0
    %136 = vmatpush1.msra.mxu0 %v119
    %137 = vmatprep.subr.mxu0 0.0
    %138 = vmatpush1.msra.mxu0 %v120
    %139 = vmatprep.subr.mxu0 0.0
    %140 = vmatpush1.msra.mxu0 %v121
    %141 = vmatprep.subr.mxu0 0.0
    %142 = vmatpush1.msra.mxu0 0.0
    %143 = vmatprep.subr.mxu0 0.0
    %144 = vmatpush1.msra.mxu0 0.0
    %145 = vmatprep.subr.mxu0 0.0
    %146 = vmatpush1.msra.mxu0 0.0
    %147 = vmatprep.subr.mxu0 0.0
    %148 = vmatpush1.msra.mxu0 0.0
    %149 = vmatprep.subr.mxu0 0.0
    %150 = vmatpush1.msra.mxu0 0.0
    %151 = vmatprep.subr.mxu0 0.0
    %152 = vmatpush1.msra.mxu0 0.0
    %153 = vmatprep.subr.mxu0 0.0
    %154 = vmatpush1.msra.mxu0 0.0
    %155 = vmatprep.subr.mxu0 0.0
    %156 = vmatpush1.msra.mxu0 0.0
    %157 = vmatprep.subr.mxu0 0.0
    %158 = vmatpush1.msra.mxu0 0.0
    %159 = vmatprep.subr.mxu0 0.0
    %160 = vmatpush1.msra.mxu0 0.0
    %161 = vmatprep.subr.mxu0 0.0
    %162 = vmatpush1.msra.mxu0 0.0
    %163 = vmatprep.subr.mxu0 0.0
    %164 = vmatpush1.msra.mxu0 0.0
    %165 = vmatprep.subr.mxu0 0.0
    %166 = vmatpush1.msra.mxu0 0.0
    %167 = vmatprep.subr.mxu0 0.0
    %168 = vmatpush1.msra.mxu0 0.0
    %169 = vmatprep.subr.mxu0 0.0
    %170 = vmatpush1.msra.mxu0 0.0
    %171 = vmatprep.subr.mxu0 0.0
    %172 = vmatpush1.msra.mxu0 0.0
    %173 = vmatprep.subr.mxu0 0.0
    %174 = vmatpush1.msra.mxu0 0.0
    %175 = vmatprep.subr.mxu0 0.0
    %176 = vmatpush1.msra.mxu0 0.0
    %177 = vmatprep.subr.mxu0 0.0
    %178 = vmatpush1.msra.mxu0 0.0
    %179 = vmatprep.subr.mxu0 0.0
    %180 = vmatpush1.msra.mxu0 0.0
    %181 = vmatprep.subr.mxu0 0.0
    %182 = vmatpush1.msra.mxu0 0.0
    %183 = vmatprep.subr.mxu0 0.0
    %184 = vmatpush1.msra.mxu0 0.0
    %185 = vmatprep.subr.mxu0 0.0
    %186 = vmatpush1.msra.mxu0 0.0
    %187 = vmatprep.subr.mxu0 0.0
    %188 = vmatpush1.msra.mxu0 0.0
    %189 = vmatprep.subr.mxu0 0.0
    %190 = vmatpush1.msra.mxu0 0.0
    %191 = vmatprep.subr.mxu0 0.0
    %192 = vmatpush1.msra.mxu0 0.0
    %193 = vmatprep.subr.mxu0 0.0
    %194 = vmatpush1.msra.mxu0 0.0
    %195 = vmatprep.subr.mxu0 0.0
    %196 = vmatpush1.msra.mxu0 0.0
    %197 = vmatprep.mubr.f32.mxu0 0.0
    %198 = vmatmul.mubr.f32.gmra.mrb[0].mxu0 %v131
    %v199 = vpop.f32.mrb[0].mxu0
    %v200 = vadd.f32 %v127, %v199
    %v201 = vpop.f32.mrb[0].mxu0
    %202 = vdwg.mxu0
    %v203 = vmax.f32 %v200, 0.0
    %v204 = vld [vmem:[%s5] sm:$0xff]
    %v205 = vld [vmem:[%s5 + $0x8] sm:$0xff]
    %v206 = vld [vmem:[%s5 + $0x10] sm:$0xff]
    %v207 = vld [vmem:[%s5 + $0x18] sm:$0xff]
    %v208 = vld [vmem:[%s6] sm:$0x1]
    %v210 = vlaneseq
    %v211 = vshrl.u32 %v210, 7
    %v212 = vsub.s32 0, %v211
    %v213 = vrot.slane %v208, %v212
    %v216 = vsel %vm129, %v203, 0
    %218 = vmatprep.subr.mxu0 0.0
    %219 = vmatpush1.msra.mxu0 %v204
    %220 = vmatprep.subr.mxu0 0.0
    %221 = vmatpush1.msra.mxu0 %v205
    %222 = vmatprep.subr.mxu0 0.0
    %223 = vmatpush1.msra.mxu0 %v206
    %224 = vmatprep.subr.mxu0 0.0
    %225 = vmatpush1.msra.mxu0 %v207
    %226 = vmatprep.subr.mxu0 0.0
    %227 = vmatpush1.msra.mxu0 0.0
    %228 = vmatprep.subr.mxu0 0.0
    %229 = vmatpush1.msra.mxu0 0.0
    %230 = vmatprep.subr.mxu0 0.0
    %231 = vmatpush1.msra.mxu0 0.0
    %232 = vmatprep.subr.mxu0 0.0
    %233 = vmatpush1.msra.mxu0 0.0
    %234 = vmatprep.subr.mxu0 0.0
    %235 = vmatpush1.msra.mxu0 0.0
    %236 = vmatprep.subr.mxu0 0.0
    %237 = vmatpush1.msra.mxu0 0.0
    %238 = vmatprep.subr.mxu0 0.0
    %239 = vmatpush1.msra.mxu0 0.0
    %240 = vmatprep.subr.mxu0 0.0
    %241 = vmatpush1.msra.mxu0 0.0
    %242 = vmatprep.subr.mxu0 0.0
    %243 = vmatpush1.msra.mxu0 0.0
    %244 = vmatprep.subr.mxu0 0.0
    %245 = vmatpush1.msra.mxu0 0.0
    %246 = vmatprep.subr.mxu0 0.0
    %247 = vmatpush1.msra.mxu0 0.0
    %248 = vmatprep.subr.mxu0 0.0
    %249 = vmatpush1.msra.mxu0 0.0
    %250 = vmatprep.subr.mxu0 0.0
    %251 = vmatpush1.msra.mxu0 0.0
    %252 = vmatprep.subr.mxu0 0.0
    %253 = vmatpush1.msra.mxu0 0.0
    %254 = vmatprep.subr.mxu0 0.0
    %255 = vmatpush1.msra.mxu0 0.0
    %256 = vmatprep.subr.mxu0 0.0
    %257 = vmatpush1.msra.mxu0 0.0
    %258 = vmatprep.subr.mxu0 0.0
    %259 = vmatpush1.msra.mxu0 0.0
    %260 = vmatprep.subr.mxu0 0.0
    %261 = vmatpush1.msra.mxu0 0.0
    %262 = vmatprep.subr.mxu0 0.0
    %263 = vmatpush1.msra.mxu0 0.0
    %264 = vmatprep.subr.mxu0 0.0
    %265 = vmatpush1.msra.mxu0 0.0
    %266 = vmatprep.subr.mxu0 0.0
    %267 = vmatpush1.msra.mxu0 0.0
    %268 = vmatprep.subr.mxu0 0.0
    %269 = vmatpush1.msra.mxu0 0.0
    %270 = vmatprep.subr.mxu0 0.0
    %271 = vmatpush1.msra.mxu0 0.0
    %272 = vmatprep.subr.mxu0 0.0
    %273 = vmatpush1.msra.mxu0 0.0
    %274 = vmatprep.subr.mxu0 0.0
    %275 = vmatpush1.msra.mxu0 0.0
    %276 = vmatprep.subr.mxu0 0.0
    %277 = vmatpush1.msra.mxu0 0.0
    %278 = vmatprep.subr.mxu0 0.0
    %279 = vmatpush1.msra.mxu0 0.0
    %280 = vmatprep.subr.mxu0 0.0
    %281 = vmatpush1.msra.mxu0 0.0
    %282 = vmatprep.mubr.f32.mxu0 0.0
    %283 = vmatmul.mubr.f32.gmra.mrb[0].mxu0 %v216
    %v284 = vpop.f32.mrb[0].mxu0
    %v285 = vadd.f32 %v213, %v284
    %v286 = vpop.f32.mrb[0].mxu0
    %287 = vdwg.mxu0
    %vm288 = vcmask 130048
    %289 = vst.msk [vmem:[#allocation2] sm:$0xff] %vm288, %v285
    // Predicated region
    $region30: #{tpu_custom_call.1} parent=1 // pred_check
      _
    $region31: #{tpu_custom_call.1} parent=1 // pred_check_branch
      %291 = sbr.rel (0) target = $region33
    $region32: #{tpu_custom_call.1} parent=1 // pred_region
      %s293 = ssub.s32 128, 128
      %294 = vsyncadd [#allocation3], %s293
      %s296 = sshll.u32 [#allocation2], 4
      %s297 = int_to_ptr.vmem [resolvable:$true] %s296
      %299 = dma.vmem_to_hbm [thread:$0]  %s297, 128, %s7, [#allocation3]
    $region33: #{tpu_custom_call.1} parent=1 // pred_fallthru
      _
    // Predicated region
    $region34: #{tpu_custom_call.1} parent=1 // pred_check
      _
    $region35: #{tpu_custom_call.1} parent=1 // pred_check_branch
      %301 = sbr.rel (0) target = $region37
    $region36: #{tpu_custom_call.1} parent=1 // pred_region
      %302 = dma.done [#allocation3], 128
    $region37: #{tpu_custom_call.1} parent=1 // pred_fallthru
      _
    %303 = vsyncpa [#allocation3], 1

</llo_original>
